<compile_context>
chip_gen: v7x
topology: tpu7x:2x2x1
jax: 0.10.0
libtpu: 0.0.40
codegen_flags: <defaults>
</compile_context>

<pallas_src>
import numpy as np
import jax
import jax.numpy as jnp
from jax.experimental import pallas as pl
from jax.experimental.pallas import tpu as pltpu

DESC_DIM = 8      # descriptor feature dim (message() only uses the first 6 columns)
EDGE_DIM = 16     # EdgeDescriptor_VGfM.dim
H1 = 100          # first Linear output features
H1P = 128         # lane-padded H1
H2 = 512          # second Linear output features


def _descriptor_mix_matrices():
    """Constant (DESC_DIM, 16) matrices so that
       edge_feature[:, :15] = x_i @ M_i + x_j @ M_j   (column 15 = scalar distance)."""
    eye3 = np.eye(3, dtype=np.float32)
    m_i = np.zeros((DESC_DIM, EDGE_DIM), dtype=np.float32)
    m_j = np.zeros((DESC_DIM, EDGE_DIM), dtype=np.float32)
    # center = 0.5*c_i + 0.5*c_j
    m_i[0:3, 0:3] = 0.5 * eye3
    m_j[0:3, 0:3] = 0.5 * eye3
    # t1 = c_i - center = 0.5*c_i - 0.5*c_j
    m_i[0:3, 3:6] = 0.5 * eye3
    m_j[0:3, 3:6] = -0.5 * eye3
    # t2 = c_j - center = -0.5*c_i + 0.5*c_j
    m_i[0:3, 6:9] = -0.5 * eye3
    m_j[0:3, 6:9] = 0.5 * eye3
    # x_i[:, 3:6] -> cols 9:12 ; x_j[:, 3:6] -> cols 12:15
    m_i[3:6, 9:12] = eye3
    m_j[3:6, 12:15] = eye3
    return jnp.asarray(m_i), jnp.asarray(m_j)


def edge_encoder_kernel(xi_ref, xj_ref, w1i_ref, w1j_ref, b1_ref, w2_ref, b2_ref, out_ref):
    """Per edge-tile: h1 = sigmoid(xi@W1i + xj@W1j + b1_eff); out = sigmoid(h1@W2 + b2)."""
    h1 = (jnp.dot(xi_ref[...], w1i_ref[...], preferred_element_type=jnp.float32)
          + jnp.dot(xj_ref[...], w1j_ref[...], preferred_element_type=jnp.float32)
          + b1_ref[...])
    h1 = jax.nn.sigmoid(h1)                                           # (TE, 128)
    h2 = jnp.dot(h1, w2_ref[...], preferred_element_type=jnp.float32) + b2_ref[...]
    out_ref[...] = jax.nn.sigmoid(h2)                                 # (TE, 512)


def edge_encoder_vgfm(descriptors, edges, w1, b1, w2, b2, *, tile_e=512):
    """descriptors: (N, DESC_DIM) f32, edges: (2, E) int32 -> (E, H2) f32."""
    # gather glue in plain JAX (flow='target_to_source': i = edges[0], j = edges[1])
    x_i = descriptors[edges[0]].astype(jnp.float32)
    x_j = descriptors[edges[1]].astype(jnp.float32)
    e = x_i.shape[0]

    # Global scalar Frobenius norm over ALL edges of (c_i - c_j) -- must be computed
    # here (a tiled kernel only sees its own rows).
    diff = x_i[:, :3] - x_j[:, :3]
    distance = jnp.sqrt(jnp.sum(diff * diff))

    # Fold descriptor construction + distance into the first Linear, pad H1 -> 128.
    m_i, m_j = _descriptor_mix_matrices()                               # (8, 16)
    w1 = jnp.asarray(w1, jnp.float32).reshape(EDGE_DIM, H1)
    b1 = jnp.asarray(b1, jnp.float32).reshape(1, H1)
    w2 = jnp.asarray(w2, jnp.float32).reshape(H1, H2)
    b2 = jnp.asarray(b2, jnp.float32).reshape(1, H2)

    w1p = jnp.zeros((EDGE_DIM, H1P), jnp.float32).at[:, :H1].set(w1)    # (16, 128)
    w1i = m_i @ w1p                                                     # (8, 128)
    w1j = m_j @ w1p                                                     # (8, 128)
    b1_eff = (jnp.zeros((1, H1P), jnp.float32).at[:, :H1].set(b1)
              + distance * w1p[15:16, :])                               # (1, 128)
    w2p = jnp.zeros((H1P, H2), jnp.float32).at[:H1, :].set(w2)          # (128, 512) padded rows = 0

    # Pad E up to a multiple of the row tile (>= 8 sublanes).
    e_pad8 = max(8, ((e + 7) // 8) * 8)
    te = min(tile_e, e_pad8)
    e_pad = ((e_pad8 + te - 1) // te) * te
    if e_pad != e:
        pad = e_pad - e
        x_i = jnp.pad(x_i, ((0, pad), (0, 0)))
        x_j = jnp.pad(x_j, ((0, pad), (0, 0)))
    grid = (e_pad // te,)

    row_in = pl.BlockSpec((te, DESC_DIM), lambda i: (i, 0))
    const = lambda shape: pl.BlockSpec(shape, lambda i: (0, 0))          # weights stay resident

    out = pl.pallas_call(
        edge_encoder_kernel,
        out_shape=jax.ShapeDtypeStruct((e_pad, H2), jnp.float32),
        grid_spec=pltpu.PrefetchScalarGridSpec(
            num_scalar_prefetch=0,
            grid=grid,
            in_specs=[
                row_in,                      # x_i tile
                row_in,                      # x_j tile
                const((DESC_DIM, H1P)),      # W1i
                const((DESC_DIM, H1P)),      # W1j
                const((1, H1P)),             # b1_eff
                const((H1P, H2)),            # W2 (padded)
                const((1, H2)),              # b2
            ],
            out_specs=pl.BlockSpec((te, H2), lambda i: (i, 0)),
        ),
        compiler_params=pltpu.CompilerParams(
            dimension_semantics=("parallel",),   # megacore split on v7x; no-op v5e/v6e
        ),
    )(x_i, x_j, w1i, w1j, b1_eff, w2p, b2)

    return out[:e]


def _reference(descriptors, edges, w1, b1, w2, b2):
    """Pure-JAX reference mirroring the PyTorch module (eval mode)."""
    x_i = descriptors[edges[0]]
    x_j = descriptors[edges[1]]
    ci, cj = x_i[:, :3], x_j[:, :3]
    center = (ci + cj) * 0.5
    distance = jnp.sqrt(jnp.sum((ci - cj) ** 2))
    ef = jnp.concatenate(
        [center, ci - center, cj - center, x_i[:, 3:6], x_j[:, 3:6],
         jnp.full((x_i.shape[0], 1), distance, jnp.float32)], axis=1)
    h1 = jax.nn.sigmoid(ef @ w1 + b1.reshape(1, -1))
    return jax.nn.sigmoid(h1 @ w2 + b2.reshape(1, -1))


if __name__ == "__main__":
    key = jax.random.PRNGKey(0)
    k_desc, k_w1, k_b1, k_w2, k_b2 = jax.random.split(key, 5)

    N = 5   # nodes
    E = 8   # edges
    descriptors = jax.random.normal(k_desc, (N, DESC_DIM), dtype=jnp.float32)
    src = jnp.array([0, 1, 2, 3, 4, 0, 1, 2], dtype=jnp.int32)
    dst = jnp.array([1, 2, 3, 4, 0, 2, 3, 4], dtype=jnp.int32)
    edges = jnp.stack([src, dst], axis=0)          # (2, E)

    # nn.Linear default init: U(-1/sqrt(fan_in), 1/sqrt(fan_in)); weights stored
    # pre-transposed as (in, out) so the kernel does x @ W.
    lim1 = 1.0 / (EDGE_DIM ** 0.5)
    lim2 = 1.0 / (H1 ** 0.5)
    w1 = jax.random.uniform(k_w1, (EDGE_DIM, H1), jnp.float32, -lim1, lim1)
    b1 = jax.random.uniform(k_b1, (1, H1), jnp.float32, -lim1, lim1)
    w2 = jax.random.uniform(k_w2, (H1, H2), jnp.float32, -lim2, lim2)
    b2 = jax.random.uniform(k_b2, (1, H2), jnp.float32, -lim2, lim2)

    out = edge_encoder_vgfm(descriptors, edges, w1, b1, w2, b2)
    jax.block_until_ready(out)

    assert out.shape == (E, H2) and out.dtype == jnp.float32
    assert bool(jnp.all(jnp.isfinite(out)))

    ref = _reference(descriptors, edges, w1, b1, w2, b2)
    assert bool(jnp.allclose(out, ref, rtol=1e-5, atol=1e-5)), "mismatch vs reference"

    print("KERNEL_OK")
</pallas_src>

<mosaic_0001>
module attributes {stable_mosaic.version = 11 : i64} {
  func.func @edge_encoder_kernel(%arg0: i32, %arg1: memref<8x8xf32, #tpu.memory_space<vmem>>, %arg2: memref<8x8xf32, #tpu.memory_space<vmem>>, %arg3: memref<8x128xf32, #tpu.memory_space<vmem>>, %arg4: memref<8x128xf32, #tpu.memory_space<vmem>>, %arg5: memref<1x128xf32, #tpu.memory_space<vmem>>, %arg6: memref<128x512xf32, #tpu.memory_space<vmem>>, %arg7: memref<1x512xf32, #tpu.memory_space<vmem>>, %arg8: memref<8x512xf32, #tpu.memory_space<vmem>>) attributes {dimension_semantics = [#tpu.dimension_semantics<parallel>], iteration_bounds = array<i64: 1>, scalar_prefetch = 0 : i64, scratch_operands = 0 : i64, tpu.core_type = #tpu.core_type<tc>, window_params = [{transform_indices = @transform_0, window_bounds = array<i64: 8, 8>}, {transform_indices = @transform_1, window_bounds = array<i64: 8, 8>}, {pipeline_mode = #tpu.pipeline_mode<synchronous>, transform_indices = @transform_2, window_bounds = array<i64: 8, 128>}, {pipeline_mode = #tpu.pipeline_mode<synchronous>, transform_indices = @transform_3, window_bounds = array<i64: 8, 128>}, {pipeline_mode = #tpu.pipeline_mode<synchronous>, transform_indices = @transform_4, window_bounds = array<i64: 1, 128>}, {pipeline_mode = #tpu.pipeline_mode<synchronous>, transform_indices = @transform_5, window_bounds = array<i64: 128, 512>}, {pipeline_mode = #tpu.pipeline_mode<synchronous>, transform_indices = @transform_6, window_bounds = array<i64: 1, 512>}, {transform_indices = @transform_7, window_bounds = array<i64: 8, 512>}]} {
    %c0 = arith.constant 0 : index
    %c0_0 = arith.constant 0 : index
    %0 = vector.load %arg1[%c0, %c0_0] : memref<8x8xf32, #tpu.memory_space<vmem>>, vector<8x8xf32>
    %c0_1 = arith.constant 0 : index
    %c0_2 = arith.constant 0 : index
    %1 = vector.load %arg3[%c0_1, %c0_2] : memref<8x128xf32, #tpu.memory_space<vmem>>, vector<8x128xf32>
    %cst = arith.constant dense<0.000000e+00> : vector<8x128xf32>
    %2 = tpu.matmul %0, %1, %cst {dimension_numbers = #tpu.dot_dimension_numbers<[1], [0], [0], [1], [0, 0, 1, 1], [], []>} : vector<8x8xf32>, vector<8x128xf32>, vector<8x128xf32> -> vector<8x128xf32>
    %c0_3 = arith.constant 0 : index
    %c0_4 = arith.constant 0 : index
    %3 = vector.load %arg2[%c0_3, %c0_4] : memref<8x8xf32, #tpu.memory_space<vmem>>, vector<8x8xf32>
    %c0_5 = arith.constant 0 : index
    %c0_6 = arith.constant 0 : index
    %4 = vector.load %arg4[%c0_5, %c0_6] : memref<8x128xf32, #tpu.memory_space<vmem>>, vector<8x128xf32>
    %cst_7 = arith.constant dense<0.000000e+00> : vector<8x128xf32>
    %5 = tpu.matmul %3, %4, %cst_7 {dimension_numbers = #tpu.dot_dimension_numbers<[1], [0], [0], [1], [0, 0, 1, 1], [], []>} : vector<8x8xf32>, vector<8x128xf32>, vector<8x128xf32> -> vector<8x128xf32>
    %6 = arith.addf %2, %5 : vector<8x128xf32>
    %c0_8 = arith.constant 0 : index
    %c0_9 = arith.constant 0 : index
    %7 = vector.load %arg5[%c0_8, %c0_9] : memref<1x128xf32, #tpu.memory_space<vmem>>, vector<1x128xf32>
    %8 = vector.broadcast %7 : vector<1x128xf32> to vector<8x128xf32>
    %9 = arith.addf %6, %8 : vector<8x128xf32>
    %10 = arith.negf %9 : vector<8x128xf32>
    %11 = math.exp %10 : vector<8x128xf32>
    %cst_10 = arith.constant 1.000000e+00 : f32
    %12 = vector.broadcast %cst_10 : f32 to vector<8x128xf32>
    %13 = arith.addf %12, %11 : vector<8x128xf32>
    %14 = arith.divf %12, %13 : vector<8x128xf32>
    %c0_11 = arith.constant 0 : index
    %c0_12 = arith.constant 0 : index
    %15 = vector.load %arg6[%c0_11, %c0_12] : memref<128x512xf32, #tpu.memory_space<vmem>>, vector<128x512xf32>
    %cst_13 = arith.constant dense<0.000000e+00> : vector<8x512xf32>
    %16 = tpu.matmul %14, %15, %cst_13 {dimension_numbers = #tpu.dot_dimension_numbers<[1], [0], [0], [1], [0, 0, 1, 1], [], []>} : vector<8x128xf32>, vector<128x512xf32>, vector<8x512xf32> -> vector<8x512xf32>
    %c0_14 = arith.constant 0 : index
    %c0_15 = arith.constant 0 : index
    %17 = vector.load %arg7[%c0_14, %c0_15] : memref<1x512xf32, #tpu.memory_space<vmem>>, vector<1x512xf32>
    %18 = vector.broadcast %17 : vector<1x512xf32> to vector<8x512xf32>
    %19 = arith.addf %16, %18 : vector<8x512xf32>
    %20 = arith.negf %19 : vector<8x512xf32>
    %21 = math.exp %20 : vector<8x512xf32>
    %cst_16 = arith.constant 1.000000e+00 : f32
    %22 = vector.broadcast %cst_16 : f32 to vector<8x512xf32>
    %23 = arith.addf %22, %21 : vector<8x512xf32>
    %24 = arith.divf %22, %23 : vector<8x512xf32>
    %c0_17 = arith.constant 0 : index
    %c0_18 = arith.constant 0 : index
    %25 = vector.load %arg8[%c0_17, %c0_18] : memref<8x512xf32, #tpu.memory_space<vmem>>, vector<8x512xf32>
    tpu.vector_store %arg8[%c0_17, %c0_18], %24 {strides = array<i32>} : memref<8x512xf32, #tpu.memory_space<vmem>>, vector<8x512xf32>,
    return
  }
  func.func @transform_0(%arg0: i32) -> (i32, i32) {
    %c0_i32 = arith.constant 0 : i32
    %c0_i32_0 = arith.constant 0 : i32
    return %arg0, %c0_i32 : i32, i32
  }
  func.func @transform_1(%arg0: i32) -> (i32, i32) {
    %c0_i32 = arith.constant 0 : i32
    %c0_i32_0 = arith.constant 0 : i32
    return %arg0, %c0_i32 : i32, i32
  }
  func.func @transform_2(%arg0: i32) -> (i32, i32) {
    %c0_i32 = arith.constant 0 : i32
    %c0_i32_0 = arith.constant 0 : i32
    %c0_i32_1 = arith.constant 0 : i32
    return %c0_i32, %c0_i32_0 : i32, i32
  }
  func.func @transform_3(%arg0: i32) -> (i32, i32) {
    %c0_i32 = arith.constant 0 : i32
    %c0_i32_0 = arith.constant 0 : i32
    %c0_i32_1 = arith.constant 0 : i32
    return %c0_i32, %c0_i32_0 : i32, i32
  }
  func.func @transform_4(%arg0: i32) -> (i32, i32) {
    %c0_i32 = arith.constant 0 : i32
    %c0_i32_0 = arith.constant 0 : i32
    %c0_i32_1 = arith.constant 0 : i32
    return %c0_i32, %c0_i32_0 : i32, i32
  }
  func.func @transform_5(%arg0: i32) -> (i32, i32) {
    %c0_i32 = arith.constant 0 : i32
    %c0_i32_0 = arith.constant 0 : i32
    %c0_i32_1 = arith.constant 0 : i32
    return %c0_i32, %c0_i32_0 : i32, i32
  }
  func.func @transform_6(%arg0: i32) -> (i32, i32) {
    %c0_i32 = arith.constant 0 : i32
    %c0_i32_0 = arith.constant 0 : i32
    %c0_i32_1 = arith.constant 0 : i32
    return %c0_i32, %c0_i32_0 : i32, i32
  }
  func.func @transform_7(%arg0: i32) -> (i32, i32) {
    %c0_i32 = arith.constant 0 : i32
    %c0_i32_0 = arith.constant 0 : i32
    return %arg0, %c0_i32 : i32, i32
  }
}

</mosaic_0001>

<llo_original>
// kernel: tpu_custom_call.1
$region0: #{tpu_custom_call.1}
  #allocation0 [shape = 'u32[]', space=smem, size = 0x4, offset = 0x4, fixed_abs, tag = 'smem constant byte address 0x4 - core index']
  #allocation1 [shape = 'u32[144,128]{1,0:T(1,128)}', space=vmem, size = 0x12000, scoped, tag = 'internal scratch']
  %s0 = inlined_call_operand.hbm [shape: f32[8,8], index: 0, kind: input, shape index: {}]
  %s1 = inlined_call_operand.hbm [shape: f32[8,8], index: 1, kind: input, shape index: {}]
  %s2 = inlined_call_operand.hbm [shape: f32[8,128], index: 2, kind: input, shape index: {}]
  %s3 = inlined_call_operand.vmem [shape: f32[8,128], index: 3, kind: input, shape index: {}]
  %s4 = inlined_call_operand.vmem [shape: f32[1,128], index: 4, kind: input, shape index: {}]
  %s5 = inlined_call_operand.hbm [shape: f32[128,512], index: 5, kind: input, shape index: {}]
  %s6 = inlined_call_operand.vmem [shape: f32[1,512], index: 6, kind: input, shape index: {}]
  %s7 = inlined_call_operand.hbm [shape: f32[8,512], index: 7, kind: output, shape index: {}]
  %s8 = sld [smem:[#allocation0]]
  $region54: #{tpu_custom_call.1} parent=0
    _
  %s10 = ssub.s32 1, %s8
  %s11 = scalar_select 0, %s10, %s8
  $region1: #{tpu_custom_call.1} parent=0
    #allocation2 [shape = 'u8[4096]{0}', space=vmem, size = 0x1000, scoped, tag = 'input window, operand 0, single buffered']
    #allocation3 [shape = 's32[1]{0}', space=sflag, size = 0x4, scoped, tag = 'scoped memory for tpu_custom_call.1']
    #allocation4 [shape = 's32[1]{0}', space=sflag, size = 0x4, scoped, tag = 'scoped memory for tpu_custom_call.1']
    #allocation5 [shape = 'u8[4096]{0}', space=vmem, size = 0x1000, scoped, tag = 'input window, operand 1, single buffered']
    #allocation6 [shape = 's32[1]{0}', space=sflag, size = 0x4, scoped, tag = 'scoped memory for tpu_custom_call.1']
    #allocation7 [shape = 'u8[4096]{0}', space=vmem, size = 0x1000, scoped, tag = 'input window, operand 2, single buffered']
    #allocation8 [shape = 'u8[262144]{0}', space=vmem, size = 0x40000, scoped, tag = 'input window, operand 5, single buffered']
    #allocation9 [shape = 's32[1]{0}', space=sflag, size = 0x4, scoped, tag = 'scoped memory for tpu_custom_call.1']
    #allocation10 [shape = 'u8[16384]{0}', space=vmem, size = 0x4000, scoped, tag = 'output window, operand 0, single buffered']
    %12 = vsyncpa [#allocation3], 0
    %13 = vsyncpa [#allocation6], 0
    %14 = vsyncpa [#allocation9], 0
    %15 = vsyncpa [#allocation4], 0
    // Predicated region
    $region2: #{tpu_custom_call.1} parent=1 // pred_check
      _
    $region3: #{tpu_custom_call.1} parent=1 // pred_check_branch
      %17 = sbr.rel (0) target = $region5
    $region4: #{tpu_custom_call.1} parent=1 // pred_region
      %s19 = ssub.s32 128, 128
      %20 = vsyncadd [#allocation3], %s19
      %s22 = sshll.u32 [#allocation2], 4
      %s23 = int_to_ptr.vmem [resolvable:$true] %s22
      %25 = dma.hbm_to_vmem [thread:$0]  %s0, 128, %s23, [#allocation3]
    $region5: #{tpu_custom_call.1} parent=1 // pred_fallthru
      _
    // Predicated region
    $region6: #{tpu_custom_call.1} parent=1 // pred_check
      _
    $region7: #{tpu_custom_call.1} parent=1 // pred_check_branch
      %27 = sbr.rel (0) target = $region9
    $region8: #{tpu_custom_call.1} parent=1 // pred_region
      %s29 = ssub.s32 128, 128
      %30 = vsyncadd [#allocation6], %s29
      %s32 = sshll.u32 [#allocation5], 4
      %s33 = int_to_ptr.vmem [resolvable:$true] %s32
      %35 = dma.hbm_to_vmem [thread:$0]  %s1, 128, %s33, [#allocation6]
    $region9: #{tpu_custom_call.1} parent=1 // pred_fallthru
      _
    // Predicated region
    $region10: #{tpu_custom_call.1} parent=1 // pred_check
      _
    $region11: #{tpu_custom_call.1} parent=1 // pred_check_branch
      %37 = sbr.rel (0) target = $region13
    $region12: #{tpu_custom_call.1} parent=1 // pred_region
      %s39 = ssub.s32 128, 128
      %40 = vsyncadd [#allocation6], %s39
      %s42 = sshll.u32 [#allocation7], 4
      %s43 = int_to_ptr.vmem [resolvable:$true] %s42
      %45 = dma.hbm_to_vmem [thread:$0]  %s2, 128, %s43, [#allocation6]
    $region13: #{tpu_custom_call.1} parent=1 // pred_fallthru
      _
    // Predicated region
    $region14: #{tpu_custom_call.1} parent=1 // pred_check
      _
    $region15: #{tpu_custom_call.1} parent=1 // pred_check_branch
      %47 = sbr.rel (0) target = $region17
    $region16: #{tpu_custom_call.1} parent=1 // pred_region
      _
    $region17: #{tpu_custom_call.1} parent=1 // pred_fallthru
      _
    // Predicated region
    $region18: #{tpu_custom_call.1} parent=1 // pred_check
      _
    $region19: #{tpu_custom_call.1} parent=1 // pred_check_branch
      %49 = sbr.rel (0) target = $region21
    $region20: #{tpu_custom_call.1} parent=1 // pred_region
      _
    $region21: #{tpu_custom_call.1} parent=1 // pred_fallthru
      _
    // Predicated region
    $region22: #{tpu_custom_call.1} parent=1 // pred_check
      _
    $region23: #{tpu_custom_call.1} parent=1 // pred_check_branch
      %51 = sbr.rel (0) target = $region25
    $region24: #{tpu_custom_call.1} parent=1 // pred_region
      %s53 = ssub.s32 8192, 8192
      %54 = vsyncadd [#allocation9], %s53
      %s55 = sshll.u32 [#allocation8], 4
      %s56 = int_to_ptr.vmem [resolvable:$true] %s55
      %61 = dma.hbm_to_vmem [thread:$0]  %s5, 8192, %s56, [#allocation9], 512, 512, 32
    $region25: #{tpu_custom_call.1} parent=1 // pred_fallthru
      _
    // Predicated region
    $region26: #{tpu_custom_call.1} parent=1 // pred_check
      _
    $region27: #{tpu_custom_call.1} parent=1 // pred_check_branch
      %63 = sbr.rel (0) target = $region29
    $region28: #{tpu_custom_call.1} parent=1 // pred_region
      _
    $region29: #{tpu_custom_call.1} parent=1 // pred_fallthru
      _
    // Predicated region
    $region30: #{tpu_custom_call.1} parent=1 // pred_check
      _
    $region31: #{tpu_custom_call.1} parent=1 // pred_check_branch
      %65 = sbr.rel (0) target = $region33
    $region32: #{tpu_custom_call.1} parent=1 // pred_region
      %66 = dma.done [#allocation3], 128
    $region33: #{tpu_custom_call.1} parent=1 // pred_fallthru
      _
    // Predicated region
    $region34: #{tpu_custom_call.1} parent=1 // pred_check
      _
    $region35: #{tpu_custom_call.1} parent=1 // pred_check_branch
      %68 = sbr.rel (0) target = $region37
    $region36: #{tpu_custom_call.1} parent=1 // pred_region
      %69 = dma.done [#allocation6], 128
    $region37: #{tpu_custom_call.1} parent=1 // pred_fallthru
      _
    // Predicated region
    $region38: #{tpu_custom_call.1} parent=1 // pred_check
      _
    $region39: #{tpu_custom_call.1} parent=1 // pred_check_branch
      %71 = sbr.rel (0) target = $region41
    $region40: #{tpu_custom_call.1} parent=1 // pred_region
      %72 = dma.done [#allocation6], 128
    $region41: #{tpu_custom_call.1} parent=1 // pred_fallthru
      _
    // Predicated region
    $region42: #{tpu_custom_call.1} parent=1 // pred_check
      _
    $region43: #{tpu_custom_call.1} parent=1 // pred_check_branch
      %74 = sbr.rel (0) target = $region45
    $region44: #{tpu_custom_call.1} parent=1 // pred_region
      %75 = dma.done [#allocation9], 8192
    $region45: #{tpu_custom_call.1} parent=1 // pred_fallthru
      _
    %v76 = vld [vmem:[#allocation2] sm:$0xff]
    %v77 = vld [vmem:[#allocation7] sm:$0xff]
    %v78 = vld [vmem:[#allocation5] sm:$0xff]
    %v79 = vld [vmem:[%s3] sm:$0xff]
    %vm80 = vcmask 64512
    %v82 = vsel %vm80, %v78, 0
    %84 = vmatprep.subr.mxu0 0.0
    %85 = vmatpush1.msra.mxu0 %v79
    %86 = vmatprep.subr.mxu0 0.0
    %87 = vmatpush1.msra.mxu0 0.0
    %88 = vmatprep.subr.mxu0 0.0
    %89 = vmatpush1.msra.mxu0 0.0
    %90 = vmatprep.subr.mxu0 0.0
    %91 = vmatpush1.msra.mxu0 0.0
    %92 = vmatprep.subr.mxu0 0.0
    %93 = vmatpush1.msra.mxu0 0.0
    %94 = vmatprep.subr.mxu0 0.0
    %95 = vmatpush1.msra.mxu0 0.0
    %96 = vmatprep.subr.mxu0 0.0
    %97 = vmatpush1.msra.mxu0 0.0
    %98 = vmatprep.subr.mxu0 0.0
    %99 = vmatpush1.msra.mxu0 0.0
    %100 = vmatprep.subr.mxu0 0.0
    %101 = vmatpush1.msra.mxu0 0.0
    %102 = vmatprep.subr.mxu0 0.0
    %103 = vmatpush1.msra.mxu0 0.0
    %104 = vmatprep.subr.mxu0 0.0
    %105 = vmatpush1.msra.mxu0 0.0
    %106 = vmatprep.subr.mxu0 0.0
    %107 = vmatpush1.msra.mxu0 0.0
    %108 = vmatprep.subr.mxu0 0.0
    %109 = vmatpush1.msra.mxu0 0.0
    %110 = vmatprep.subr.mxu0 0.0
    %111 = vmatpush1.msra.mxu0 0.0
    %112 = vmatprep.subr.mxu0 0.0
    %113 = vmatpush1.msra.mxu0 0.0
    %114 = vmatprep.subr.mxu0 0.0
    %115 = vmatpush1.msra.mxu0 0.0
    %116 = vmatprep.subr.mxu0 0.0
    %117 = vmatpush1.msra.mxu0 0.0
    %118 = vmatprep.subr.mxu0 0.0
    %119 = vmatpush1.msra.mxu0 0.0
    %120 = vmatprep.subr.mxu0 0.0
    %121 = vmatpush1.msra.mxu0 0.0
    %122 = vmatprep.subr.mxu0 0.0
    %123 = vmatpush1.msra.mxu0 0.0
    %124 = vmatprep.subr.mxu0 0.0
    %125 = vmatpush1.msra.mxu0 0.0
    %126 = vmatprep.subr.mxu0 0.0
    %127 = vmatpush1.msra.mxu0 0.0
    %128 = vmatprep.subr.mxu0 0.0
    %129 = vmatpush1.msra.mxu0 0.0
    %130 = vmatprep.subr.mxu0 0.0
    %131 = vmatpush1.msra.mxu0 0.0
    %132 = vmatprep.subr.mxu0 0.0
    %133 = vmatpush1.msra.mxu0 0.0
    %134 = vmatprep.subr.mxu0 0.0
    %135 = vmatpush1.msra.mxu0 0.0
    %136 = vmatprep.subr.mxu0 0.0
    %137 = vmatpush1.msra.mxu0 0.0
    %138 = vmatprep.subr.mxu0 0.0
    %139 = vmatpush1.msra.mxu0 0.0
    %140 = vmatprep.subr.mxu0 0.0
    %141 = vmatpush1.msra.mxu0 0.0
    %142 = vmatprep.subr.mxu0 0.0
    %143 = vmatpush1.msra.mxu0 0.0
    %144 = vmatprep.subr.mxu0 0.0
    %145 = vmatpush1.msra.mxu0 0.0
    %146 = vmatprep.subr.mxu0 0.0
    %147 = vmatpush1.msra.mxu0 0.0
    %148 = vmatprep.mubr.f32.mxu0 0.0
    %149 = vmatmul.mubr.f32.gmra.mrb[0].mxu0 %v82
    %v150 = vpop.f32.mrb[0].mxu0
    %v151 = vadd.f32 0.0, %v150
    %v152 = vpop.f32.mrb[0].mxu0
    %153 = vdwg.mxu0
    %v155 = vsel %vm80, %v76, 0
    %157 = vmatprep.subr.mxu0 0.0
    %158 = vmatpush1.msra.mxu0 %v77
    %159 = vmatprep.subr.mxu0 0.0
    %160 = vmatpush1.msra.mxu0 0.0
    %161 = vmatprep.subr.mxu0 0.0
    %162 = vmatpush1.msra.mxu0 0.0
    %163 = vmatprep.subr.mxu0 0.0
    %164 = vmatpush1.msra.mxu0 0.0
    %165 = vmatprep.subr.mxu0 0.0
    %166 = vmatpush1.msra.mxu0 0.0
    %167 = vmatprep.subr.mxu0 0.0
    %168 = vmatpush1.msra.mxu0 0.0
    %169 = vmatprep.subr.mxu0 0.0
    %170 = vmatpush1.msra.mxu0 0.0
    %171 = vmatprep.subr.mxu0 0.0
    %172 = vmatpush1.msra.mxu0 0.0
    %173 = vmatprep.subr.mxu0 0.0
    %174 = vmatpush1.msra.mxu0 0.0
    %175 = vmatprep.subr.mxu0 0.0
    %176 = vmatpush1.msra.mxu0 0.0
    %177 = vmatprep.subr.mxu0 0.0
    %178 = vmatpush1.msra.mxu0 0.0
    %179 = vmatprep.subr.mxu0 0.0
    %180 = vmatpush1.msra.mxu0 0.0
    %181 = vmatprep.subr.mxu0 0.0
    %182 = vmatpush1.msra.mxu0 0.0
    %183 = vmatprep.subr.mxu0 0.0
    %184 = vmatpush1.msra.mxu0 0.0
    %185 = vmatprep.subr.mxu0 0.0
    %186 = vmatpush1.msra.mxu0 0.0
    %187 = vmatprep.subr.mxu0 0.0
    %188 = vmatpush1.msra.mxu0 0.0
    %189 = vmatprep.subr.mxu0 0.0
    %190 = vmatpush1.msra.mxu0 0.0
    %191 = vmatprep.subr.mxu0 0.0
    %192 = vmatpush1.msra.mxu0 0.0
    %193 = vmatprep.subr.mxu0 0.0
    %194 = vmatpush1.msra.mxu0 0.0
    %195 = vmatprep.subr.mxu0 0.0
    %196 = vmatpush1.msra.mxu0 0.0
    %197 = vmatprep.subr.mxu0 0.0
    %198 = vmatpush1.msra.mxu0 0.0
    %199 = vmatprep.subr.mxu0 0.0
    %200 = vmatpush1.msra.mxu0 0.0
    %201 = vmatprep.subr.mxu0 0.0
    %202 = vmatpush1.msra.mxu0 0.0
    %203 = vmatprep.subr.mxu0 0.0
    %204 = vmatpush1.msra.mxu0 0.0
    %205 = vmatprep.subr.mxu0 0.0
    %206 = vmatpush1.msra.mxu0 0.0
    %207 = vmatprep.subr.mxu0 0.0
    %208 = vmatpush1.msra.mxu0 0.0
    %209 = vmatprep.subr.mxu0 0.0
    %210 = vmatpush1.msra.mxu0 0.0
    %211 = vmatprep.subr.mxu0 0.0
    %212 = vmatpush1.msra.mxu0 0.0
    %213 = vmatprep.subr.mxu0 0.0
    %214 = vmatpush1.msra.mxu0 0.0
    %215 = vmatprep.subr.mxu0 0.0
    %216 = vmatpush1.msra.mxu0 0.0
    %217 = vmatprep.subr.mxu0 0.0
    %218 = vmatpush1.msra.mxu0 0.0
    %219 = vmatprep.subr.mxu0 0.0
    %220 = vmatpush1.msra.mxu0 0.0
    %221 = vmatprep.mubr.f32.mxu0 0.0
    %222 = vmatmul.mubr.f32.gmra.mrb[0].mxu0 %v155
    %v223 = vpop.f32.mrb[0].mxu0
    %v224 = vadd.f32 %v151, %v223
    %v225 = vpop.f32.mrb[0].mxu0
    %226 = vdwg.mxu0
    %v227 = vld [vmem:[%s4] sm:$0x1]
    %v229 = vlaneseq
    %v230 = vshrl.u32 %v229, 7
    %v231 = vsub.s32 0, %v230
    %v232 = vrot.slane %v227, %v231
    %v234 = vadd.f32 %v224, %v232
    %v235 = vxor.u32 %v234, 2147483648
    %v236 = vmul.f32 %v235, 1.442695
    %v237 = vpow.pop %v236
    %v238 = vadd.f32 %v237, 1.0
    %v239 = vrcp.pop %v238
    %v240 = vmul.f32 1.0, %v239
    %v241 = vld [vmem:[#allocation8] sm:$0xff]
    %v242 = vld [vmem:[#allocation8 + $0x8] sm:$0xff]
    %v243 = vld [vmem:[#allocation8 + $0x10] sm:$0xff]
    %v244 = vld [vmem:[#allocation8 + $0x18] sm:$0xff]
    %v245 = vld [vmem:[#allocation8 + $0x20] sm:$0xff]
    %v246 = vld [vmem:[#allocation8 + $0x28] sm:$0xff]
    %v247 = vld [vmem:[#allocation8 + $0x30] sm:$0xff]
    %v248 = vld [vmem:[#allocation8 + $0x38] sm:$0xff]
    %v249 = vld [vmem:[#allocation8 + $0x40] sm:$0xff]
    %v250 = vld [vmem:[#allocation8 + $0x48] sm:$0xff]
    %v251 = vld [vmem:[#allocation8 + $0x50] sm:$0xff]
    %v252 = vld [vmem:[#allocation8 + $0x58] sm:$0xff]
    %v253 = vld [vmem:[#allocation8 + $0x60] sm:$0xff]
    %v254 = vld [vmem:[#allocation8 + $0x68] sm:$0xff]
    %v255 = vld [vmem:[#allocation8 + $0x70] sm:$0xff]
    %v256 = vld [vmem:[#allocation8 + $0x78] sm:$0xff]
    %v257 = vld [vmem:[#allocation8 + $0x80] sm:$0xff]
    %v258 = vld [vmem:[#allocation8 + $0x88] sm:$0xff]
    %v259 = vld [vmem:[#allocation8 + $0x90] sm:$0xff]
    %v260 = vld [vmem:[#allocation8 + $0x98] sm:$0xff]
    %v261 = vld [vmem:[#allocation8 + $0xa0] sm:$0xff]
    %v262 = vld [vmem:[#allocation8 + $0xa8] sm:$0xff]
    %v263 = vld [vmem:[#allocation8 + $0xb0] sm:$0xff]
    %v264 = vld [vmem:[#allocation8 + $0xb8] sm:$0xff]
    %v265 = vld [vmem:[#allocation8 + $0xc0] sm:$0xff]
    %v266 = vld [vmem:[#allocation8 + $0xc8] sm:$0xff]
    %v267 = vld [vmem:[#allocation8 + $0xd0] sm:$0xff]
    %v268 = vld [vmem:[#allocation8 + $0xd8] sm:$0xff]
    %v269 = vld [vmem:[#allocation8 + $0xe0] sm:$0xff]
    %v270 = vld [vmem:[#allocation8 + $0xe8] sm:$0xff]
    %v271 = vld [vmem:[#allocation8 + $0xf0] sm:$0xff]
    %v272 = vld [vmem:[#allocation8 + $0xf8] sm:$0xff]
    %v273 = vld [vmem:[#allocation8 + $0x100] sm:$0xff]
    %v274 = vld [vmem:[#allocation8 + $0x108] sm:$0xff]
    %v275 = vld [vmem:[#allocation8 + $0x110] sm:$0xff]
    %v276 = vld [vmem:[#allocation8 + $0x118] sm:$0xff]
    %v277 = vld [vmem:[#allocation8 + $0x120] sm:$0xff]
    %v278 = vld [vmem:[#allocation8 + $0x128] sm:$0xff]
    %v279 = vld [vmem:[#allocation8 + $0x130] sm:$0xff]
    %v280 = vld [vmem:[#allocation8 + $0x138] sm:$0xff]
    %v281 = vld [vmem:[#allocation8 + $0x140] sm:$0xff]
    %v282 = vld [vmem:[#allocation8 + $0x148] sm:$0xff]
    %v283 = vld [vmem:[#allocation8 + $0x150] sm:$0xff]
    %v284 = vld [vmem:[#allocation8 + $0x158] sm:$0xff]
    %v285 = vld [vmem:[#allocation8 + $0x160] sm:$0xff]
    %v286 = vld [vmem:[#allocation8 + $0x168] sm:$0xff]
    %v287 = vld [vmem:[#allocation8 + $0x170] sm:$0xff]
    %v288 = vld [vmem:[#allocation8 + $0x178] sm:$0xff]
    %v289 = vld [vmem:[#allocation8 + $0x180] sm:$0xff]
    %v290 = vld [vmem:[#allocation8 + $0x188] sm:$0xff]
    %v291 = vld [vmem:[#allocation8 + $0x190] sm:$0xff]
    %v292 = vld [vmem:[#allocation8 + $0x198] sm:$0xff]
    %v293 = vld [vmem:[#allocation8 + $0x1a0] sm:$0xff]
    %v294 = vld [vmem:[#allocation8 + $0x1a8] sm:$0xff]
    %v295 = vld [vmem:[#allocation8 + $0x1b0] sm:$0xff]
    %v296 = vld [vmem:[#allocation8 + $0x1b8] sm:$0xff]
    %v297 = vld [vmem:[#allocation8 + $0x1c0] sm:$0xff]
    %v298 = vld [vmem:[#allocation8 + $0x1c8] sm:$0xff]
    %v299 = vld [vmem:[#allocation8 + $0x1d0] sm:$0xff]
    %v300 = vld [vmem:[#allocation8 + $0x1d8] sm:$0xff]
    %v301 = vld [vmem:[#allocation8 + $0x1e0] sm:$0xff]
    %v302 = vld [vmem:[#allocation8 + $0x1e8] sm:$0xff]
    %v303 = vld [vmem:[#allocation8 + $0x1f0] sm:$0xff]
    %v304 = vld [vmem:[#allocation8 + $0x1f8] sm:$0xff]
    %v305 = vld [vmem:[%s6] sm:$0xf]
    %v307 = vlaneseq
    %v308 = vshrl.u32 %v307, 7
    %v309 = vsub.s32 0, %v308
    %v310 = vrot.slane %v305, %v309
    %v311 = vlaneseq
    %v312 = vshrl.u32 %v311, 7
    %v313 = vsub.s32 1, %v312
    %v314 = vrot.slane %v305, %v313
    %v315 = vlaneseq
    %v316 = vshrl.u32 %v315, 7
    %v317 = vsub.s32 2, %v316
    %v318 = vrot.slane %v305, %v317
    %v319 = vlaneseq
    %v320 = vshrl.u32 %v319, 7
    %v321 = vsub.s32 3, %v320
    %v322 = vrot.slane %v305, %v321
    %327 = vmatprep.subr.mxu0 %v242
    %328 = vmatpush1.msra.mxu0 %v241
    %329 = vmatprep.subr.mxu0 %v246
    %330 = vmatpush1.msra.mxu0 %v245
    %331 = vmatprep.subr.mxu0 %v250
    %332 = vmatpush1.msra.mxu0 %v249
    %333 = vmatprep.subr.mxu0 %v254
    %334 = vmatpush1.msra.mxu0 %v253
    %335 = vmatprep.subr.mxu0 %v258
    %336 = vmatpush1.msra.mxu0 %v257
    %337 = vmatprep.subr.mxu0 %v262
    %338 = vmatpush1.msra.mxu0 %v261
    %339 = vmatprep.subr.mxu0 %v266
    %340 = vmatpush1.msra.mxu0 %v265
    %341 = vmatprep.subr.mxu0 %v270
    %342 = vmatpush1.msra.mxu0 %v269
    %343 = vmatprep.subr.mxu0 %v274
    %344 = vmatpush1.msra.mxu0 %v273
    %345 = vmatprep.subr.mxu0 %v278
    %346 = vmatpush1.msra.mxu0 %v277
    %347 = vmatprep.subr.mxu0 %v282
    %348 = vmatpush1.msra.mxu0 %v281
    %349 = vmatprep.subr.mxu0 %v286
    %350 = vmatpush1.msra.mxu0 %v285
    %351 = vmatprep.subr.mxu0 %v290
    %352 = vmatpush1.msra.mxu0 %v289
    %353 = vmatprep.subr.mxu0 %v294
    %354 = vmatpush1.msra.mxu0 %v293
    %355 = vmatprep.subr.mxu0 %v298
    %356 = vmatpush1.msra.mxu0 %v297
    %357 = vmatprep.subr.mxu0 %v302
    %358 = vmatpush1.msra.mxu0 %v301
    %359 = vmatprep.subr.mxu0 0.0
    %360 = vmatpush1.msra.mxu0 0.0
    %361 = vmatprep.subr.mxu0 0.0
    %362 = vmatpush1.msra.mxu0 0.0
    %363 = vmatprep.subr.mxu0 0.0
    %364 = vmatpush1.msra.mxu0 0.0
    %365 = vmatprep.subr.mxu0 0.0
    %366 = vmatpush1.msra.mxu0 0.0
    %367 = vmatprep.subr.mxu0 0.0
    %368 = vmatpush1.msra.mxu0 0.0
    %369 = vmatprep.subr.mxu0 0.0
    %370 = vmatpush1.msra.mxu0 0.0
    %371 = vmatprep.subr.mxu0 0.0
    %372 = vmatpush1.msra.mxu0 0.0
    %373 = vmatprep.subr.mxu0 0.0
    %374 = vmatpush1.msra.mxu0 0.0
    %375 = vmatprep.subr.mxu0 0.0
    %376 = vmatpush1.msra.mxu0 0.0
    %377 = vmatprep.subr.mxu0 0.0
    %378 = vmatpush1.msra.mxu0 0.0
    %379 = vmatprep.subr.mxu0 0.0
    %380 = vmatpush1.msra.mxu0 0.0
    %381 = vmatprep.subr.mxu0 0.0
    %382 = vmatpush1.msra.mxu0 0.0
    %383 = vmatprep.subr.mxu0 0.0
    %384 = vmatpush1.msra.mxu0 0.0
    %385 = vmatprep.subr.mxu0 0.0
    %386 = vmatpush1.msra.mxu0 0.0
    %387 = vmatprep.subr.mxu0 0.0
    %388 = vmatpush1.msra.mxu0 0.0
    %389 = vmatprep.subr.mxu0 0.0
    %390 = vmatpush1.msra.mxu0 0.0
    %391 = vmatprep.mubr.f32.mxu0 0.0
    %392 = vmatmul.mubr.f32.gmra.mrb[0].mxu0 %v240
    %v393 = vpop.f32.mrb[0].mxu0
    %v394 = vadd.f32 %v310, %v393
    %v395 = vpop.f32.mrb[0].mxu0
    %v396 = vadd.f32 %v314, %v395
    %397 = vdwg.mxu0
    %398 = vmatprep.subr.mxu0 %v244
    %399 = vmatpush1.msra.mxu0 %v243
    %400 = vmatprep.subr.mxu0 %v248
    %401 = vmatpush1.msra.mxu0 %v247
    %402 = vmatprep.subr.mxu0 %v252
    %403 = vmatpush1.msra.mxu0 %v251
    %404 = vmatprep.subr.mxu0 %v256
    %405 = vmatpush1.msra.mxu0 %v255
    %406 = vmatprep.subr.mxu0 %v260
    %407 = vmatpush1.msra.mxu0 %v259
    %408 = vmatprep.subr.mxu0 %v264
    %409 = vmatpush1.msra.mxu0 %v263
    %410 = vmatprep.subr.mxu0 %v268
    %411 = vmatpush1.msra.mxu0 %v267
    %412 = vmatprep.subr.mxu0 %v272
    %413 = vmatpush1.msra.mxu0 %v271
    %414 = vmatprep.subr.mxu0 %v276
    %415 = vmatpush1.msra.mxu0 %v275
    %416 = vmatprep.subr.mxu0 %v280
    %417 = vmatpush1.msra.mxu0 %v279
    %418 = vmatprep.subr.mxu0 %v284
    %419 = vmatpush1.msra.mxu0 %v283
    %420 = vmatprep.subr.mxu0 %v288
    %421 = vmatpush1.msra.mxu0 %v287
    %422 = vmatprep.subr.mxu0 %v292
    %423 = vmatpush1.msra.mxu0 %v291
    %424 = vmatprep.subr.mxu0 %v296
    %425 = vmatpush1.msra.mxu0 %v295
    %426 = vmatprep.subr.mxu0 %v300
    %427 = vmatpush1.msra.mxu0 %v299
    %428 = vmatprep.subr.mxu0 %v304
    %429 = vmatpush1.msra.mxu0 %v303
    %430 = vmatprep.subr.mxu0 0.0
    %431 = vmatpush1.msra.mxu0 0.0
    %432 = vmatprep.subr.mxu0 0.0
    %433 = vmatpush1.msra.mxu0 0.0
    %434 = vmatprep.subr.mxu0 0.0
    %435 = vmatpush1.msra.mxu0 0.0
    %436 = vmatprep.subr.mxu0 0.0
    %437 = vmatpush1.msra.mxu0 0.0
    %438 = vmatprep.subr.mxu0 0.0
    %439 = vmatpush1.msra.mxu0 0.0
    %440 = vmatprep.subr.mxu0 0.0
    %441 = vmatpush1.msra.mxu0 0.0
    %442 = vmatprep.subr.mxu0 0.0
    %443 = vmatpush1.msra.mxu0 0.0
    %444 = vmatprep.subr.mxu0 0.0
    %445 = vmatpush1.msra.mxu0 0.0
    %446 = vmatprep.subr.mxu0 0.0
    %447 = vmatpush1.msra.mxu0 0.0
    %448 = vmatprep.subr.mxu0 0.0
    %449 = vmatpush1.msra.mxu0 0.0
    %450 = vmatprep.subr.mxu0 0.0
    %451 = vmatpush1.msra.mxu0 0.0
    %452 = vmatprep.subr.mxu0 0.0
    %453 = vmatpush1.msra.mxu0 0.0
    %454 = vmatprep.subr.mxu0 0.0
    %455 = vmatpush1.msra.mxu0 0.0
    %456 = vmatprep.subr.mxu0 0.0
    %457 = vmatpush1.msra.mxu0 0.0
    %458 = vmatprep.subr.mxu0 0.0
    %459 = vmatpush1.msra.mxu0 0.0
    %460 = vmatprep.subr.mxu0 0.0
    %461 = vmatpush1.msra.mxu0 0.0
    %462 = vmatprep.mubr.f32.mxu0 0.0
    %463 = vmatmul.mubr.f32.gmra.mrb[0].mxu0 %v240
    %v464 = vpop.f32.mrb[0].mxu0
    %v465 = vadd.f32 %v318, %v464
    %v466 = vpop.f32.mrb[0].mxu0
    %v467 = vadd.f32 %v322, %v466
    %468 = vdwg.mxu0
    %v469 = vxor.u32 %v394, 2147483648
    %v470 = vxor.u32 %v396, 2147483648
    %v471 = vxor.u32 %v465, 2147483648
    %v472 = vxor.u32 %v467, 2147483648
    %v473 = vmul.f32 %v469, 1.442695
    %v474 = vpow.pop %v473
    %v475 = vmul.f32 %v470, 1.442695
    %v476 = vpow.pop %v475
    %v477 = vmul.f32 %v471, 1.442695
    %v478 = vpow.pop %v477
    %v479 = vmul.f32 %v472, 1.442695
    %v480 = vpow.pop %v479
    %v481 = vadd.f32 %v474, 1.0
    %v482 = vadd.f32 %v476, 1.0
    %v483 = vadd.f32 %v478, 1.0
    %v484 = vadd.f32 %v480, 1.0
    %v485 = vrcp.pop %v481
    %v486 = vmul.f32 1.0, %v485
    %v487 = vrcp.pop %v482
    %v488 = vmul.f32 1.0, %v487
    %v489 = vrcp.pop %v483
    %v490 = vmul.f32 1.0, %v489
    %v491 = vrcp.pop %v484
    %v492 = vmul.f32 1.0, %v491
    %493 = vst [vmem:[#allocation10] sm:$0xff] %v486
    %494 = vst [vmem:[#allocation10 + $0x8] sm:$0xff] %v488
    %495 = vst [vmem:[#allocation10 + $0x10] sm:$0xff] %v490
    %496 = vst [vmem:[#allocation10 + $0x18] sm:$0xff] %v492
    // Predicated region
    $region46: #{tpu_custom_call.1} parent=1 // pred_check
      _
    $region47: #{tpu_custom_call.1} parent=1 // pred_check_branch
      %498 = sbr.rel (0) target = $region49
    $region48: #{tpu_custom_call.1} parent=1 // pred_region
      %s500 = ssub.s32 512, 512
      %501 = vsyncadd [#allocation4], %s500
      %s503 = sshll.u32 [#allocation10], 4
      %s504 = int_to_ptr.vmem [resolvable:$true] %s503
      %506 = dma.vmem_to_hbm [thread:$0]  %s504, 512, %s7, [#allocation4]
    $region49: #{tpu_custom_call.1} parent=1 // pred_fallthru
      _
    // Predicated region
    $region50: #{tpu_custom_call.1} parent=1 // pred_check
      _
    $region51: #{tpu_custom_call.1} parent=1 // pred_check_branch
      %508 = sbr.rel (0) target = $region53
    $region52: #{tpu_custom_call.1} parent=1 // pred_region
      %509 = dma.done [#allocation4], 512
    $region53: #{tpu_custom_call.1} parent=1 // pred_fallthru
      _
    %510 = vsyncpa [#allocation3], 1
    %511 = vsyncpa [#allocation6], 1
    %512 = vsyncpa [#allocation9], 1
    %513 = vsyncpa [#allocation4], 1

</llo_original>
